<compile_context>
chip_gen: v6e
topology: v6e:2x2x1
jax: 0.10.0
libtpu: 0.0.40
codegen_flags: <defaults>
</compile_context>

<pallas_src>
import functools

import jax
import jax.numpy as jnp
from jax.experimental import pallas as pl
from jax.experimental.pallas import tpu as pltpu

LANE = 128
SUBLANE_BF16 = 16  # bf16 packs 16 sublanes per vreg


def _round_up(n: int, m: int) -> int:
    return ((n + m - 1) // m) * m


def _make_mlp_kernel(n_layers: int):
    """Kernel ref order: x_tile, mask, (W1, b1), ..., (Wn, bn), out_tile."""

    def kernel(*refs):
        x_ref = refs[0]
        mask_ref = refs[1]
        out_ref = refs[-1]

        h = x_ref[...]                                   # (TB, D0p) bf16
        for i in range(n_layers):
            w = refs[2 + 2 * i][...]                     # (Dp_in, Dp_out) bf16
            b = refs[3 + 2 * i][...]                     # (1, Dp_out)     f32
            # bf16 x bf16 on the MXU, f32 accumulate; bias add in f32.
            z = jnp.dot(h.astype(w.dtype), w,
                        preferred_element_type=jnp.float32) + b
            # Sigmoid via tanh identity: a single EUP transcendental per elem.
            h = 0.5 * jnp.tanh(0.5 * z) + 0.5

        # Softmax over the feature (lane) axis.  h is bounded in (0, 1), so
        # exp(h) is numerically safe without a max shift (saves one XLU reduce
        # + a full-tile VPU subtract per step).  Padded lanes are zeroed with
        # a multiplicative {0,1} mask so they don't pollute the denominator.
        e = jnp.exp(h) * mask_ref[...]
        denom = jnp.sum(e, axis=1, keepdims=True)
        inv = 1.0 / denom                                # exact, (TB, 1) only
        out_ref[...] = (e * inv).astype(out_ref.dtype)

    return kernel


def _choose_tb(batch: int, block_b: int, min_steps: int = 4) -> int:
    """Batch tile: multiple of 16 (bf16 packing), shrunk until the grid has
    >= min_steps steps (>= 2 per TensorCore on v7x) so the DMA pipeline can
    overlap compute, but never below 64 rows."""
    tb = min(block_b, _round_up(batch, SUBLANE_BF16))
    tb = _round_up(tb, SUBLANE_BF16)
    while tb > 64 and (_round_up(batch, tb) // tb) < min_steps:
        tb //= 2
    return max(tb, SUBLANE_BF16)


@functools.partial(jax.jit, static_argnames=("out_dim", "block_b"))
def mlp_forward(x, flat_params, out_dim, block_b=256):
    """x: (B, D0p) with D0p a multiple of 128 (bf16).
    flat_params: [W1, b1, W2, b2, ...] with Wi (Dp_i, Dp_{i+1}) bf16 (padded),
    bi (1, Dp_{i+1}) f32 (padded).  Returns (B, out_dim) f32 softmax probs."""
    n_layers = len(flat_params) // 2
    B, d0 = x.shape
    d_out_pad = flat_params[-1].shape[-1]

    tb = _choose_tb(B, block_b)
    bp = _round_up(B, tb)
    if bp != B:
        x = jnp.pad(x, ((0, bp - B), (0, 0)))

    # {0,1} mask over padded output lanes, resident in VMEM.
    mask = (jnp.arange(d_out_pad) < out_dim).astype(jnp.float32)[None, :]

    kernel = _make_mlp_kernel(n_layers)

    # x/out tiled over the batch grid; mask/weights/biases are full blocks
    # that stay resident in VMEM across all grid steps (index_map -> (0, 0)).
    in_specs = [pl.BlockSpec((tb, d0), lambda i: (i, 0)),
                pl.BlockSpec(mask.shape, lambda i: (0, 0))]
    for p in flat_params:
        in_specs.append(pl.BlockSpec(p.shape, lambda i: (0, 0)))

    out_shape = jax.ShapeDtypeStruct((bp, d_out_pad), jnp.float32)
    out_spec = pl.BlockSpec((tb, d_out_pad), lambda i: (i, 0))

    # VMEM budget: x/out tiles get double-buffered by the pipeline; params and
    # the mask are constant-index resident blocks (counted at 2x to be safe).
    vmem_bytes = 2 * tb * d0 * x.dtype.itemsize          # x tile (bf16)
    vmem_bytes += 2 * tb * d_out_pad * 4                 # out tile (f32)
    vmem_bytes += 2 * mask.size * 4
    for p in flat_params:
        vmem_bytes += 2 * p.size * p.dtype.itemsize
    vmem_limit = min(max(2 * vmem_bytes, 16 * 1024 * 1024), 64 * 1024 * 1024)

    out = pl.pallas_call(
        kernel,
        grid=(bp // tb,),
        in_specs=in_specs,
        out_specs=out_spec,
        out_shape=out_shape,
        compiler_params=pltpu.CompilerParams(
            dimension_semantics=("parallel",),   # split batch across TCs (v7x)
            vmem_limit_bytes=vmem_limit),
    )(x, mask, *flat_params)

    return out[:B, :out_dim]


def init_params(key, layer_dims):
    """torch.nn.Linear-style init (uniform +-1/sqrt(fan_in)), stored (in, out).

    Returns padded params: Wi zero-padded to (128-mult, 128-mult) bf16,
    bi zero-padded to (1, 128-mult) f32.  Zero-padded W rows/cols make the
    padded hidden units inert (their 0.5 sigmoid output hits zero weights)."""
    dims_pad = [_round_up(d, LANE) for d in layer_dims]
    params_pad = []
    for idx, (l, r) in enumerate(zip(layer_dims[:-1], layer_dims[1:])):
        key, kw, kb = jax.random.split(key, 3)
        bound = 1.0 / jnp.sqrt(jnp.float32(l))
        w = jax.random.uniform(kw, (l, r), jnp.float32, -bound, bound)
        b = jax.random.uniform(kb, (1, r), jnp.float32, -bound, bound)
        lp, rp = dims_pad[idx], dims_pad[idx + 1]
        w_pad = jnp.zeros((lp, rp), jnp.float32).at[:l, :r].set(w)
        b_pad = jnp.zeros((1, rp), jnp.float32).at[:, :r].set(b)
        params_pad.extend([w_pad.astype(jnp.bfloat16), b_pad])
    return params_pad


def reference_forward(x, flat_params, out_dim):
    """Pure-JAX reference mirroring the kernel's bf16-matmul / f32-math recipe."""
    h = x
    for i in range(len(flat_params) // 2):
        w, b = flat_params[2 * i], flat_params[2 * i + 1]
        z = jnp.dot(h.astype(w.dtype), w,
                    preferred_element_type=jnp.float32) + b
        h = jax.nn.sigmoid(z)
    mask = (jnp.arange(h.shape[1]) < out_dim).astype(jnp.float32)[None, :]
    e = jnp.exp(h) * mask
    return (e / jnp.sum(e, axis=1, keepdims=True))[:, :out_dim]


if __name__ == "__main__":
    # MNIST-like MLP from the PyTorch spec; batch sized so the grid has 4
    # steps (>= 2 per TensorCore on v7x) with tb=128.
    layer_dims = [64, 32, 10]
    batch = 512

    key = jax.random.PRNGKey(0)
    key, kx = jax.random.split(key)
    x = jax.random.normal(kx, (batch, layer_dims[0]), jnp.float32)

    params_pad = init_params(key, layer_dims)

    # Pad input features to the lane-padded width; bf16 for MXU/DMA.
    d0_pad = params_pad[0].shape[0]
    x_pad = jnp.pad(x, ((0, 0), (0, d0_pad - x.shape[1]))).astype(jnp.bfloat16)

    out = mlp_forward(x_pad, params_pad, out_dim=layer_dims[-1], block_b=256)
    out = jax.block_until_ready(out)

    ref = reference_forward(x_pad, params_pad, out_dim=layer_dims[-1])

    assert out.shape == (batch, layer_dims[-1])
    # Exact normalization: softmax rows sum to 1 at f32 precision.
    assert jnp.allclose(jnp.sum(out, axis=1), 1.0, atol=1e-5)
    # Matches the bf16-matmul reference (tanh-identity sigmoid vs jax.nn.sigmoid).
    assert jnp.allclose(out, ref, atol=2e-3, rtol=2e-3), (
        f"mismatch vs reference, max abs err={jnp.max(jnp.abs(out - ref))}")

    print("KERNEL_OK")
</pallas_src>

<mosaic_0001>
module attributes {stable_mosaic.version = 11 : i64} {
  func.func @kernel(%arg0: i32, %arg1: memref<128x128xbf16, #tpu.memory_space<vmem>>, %arg2: memref<1x128xf32, #tpu.memory_space<vmem>>, %arg3: memref<128x128xbf16, #tpu.memory_space<vmem>>, %arg4: memref<1x128xf32, #tpu.memory_space<vmem>>, %arg5: memref<128x128xbf16, #tpu.memory_space<vmem>>, %arg6: memref<1x128xf32, #tpu.memory_space<vmem>>, %arg7: memref<128x128xf32, #tpu.memory_space<vmem>>) attributes {dimension_semantics = [#tpu.dimension_semantics<parallel>], iteration_bounds = array<i64: 4>, scalar_prefetch = 0 : i64, scratch_operands = 0 : i64, tpu.core_type = #tpu.core_type<tc>, window_params = [{transform_indices = @transform_0, window_bounds = array<i64: 128, 128>}, {pipeline_mode = #tpu.pipeline_mode<synchronous>, transform_indices = @transform_1, window_bounds = array<i64: 1, 128>}, {pipeline_mode = #tpu.pipeline_mode<synchronous>, transform_indices = @transform_2, window_bounds = array<i64: 128, 128>}, {pipeline_mode = #tpu.pipeline_mode<synchronous>, transform_indices = @transform_3, window_bounds = array<i64: 1, 128>}, {pipeline_mode = #tpu.pipeline_mode<synchronous>, transform_indices = @transform_4, window_bounds = array<i64: 128, 128>}, {pipeline_mode = #tpu.pipeline_mode<synchronous>, transform_indices = @transform_5, window_bounds = array<i64: 1, 128>}, {transform_indices = @transform_6, window_bounds = array<i64: 128, 128>}]} {
    %c0 = arith.constant 0 : index
    %c0_0 = arith.constant 0 : index
    %0 = vector.load %arg1[%c0, %c0_0] : memref<128x128xbf16, #tpu.memory_space<vmem>>, vector<128x128xbf16>
    %c0_1 = arith.constant 0 : index
    %c0_2 = arith.constant 0 : index
    %1 = vector.load %arg3[%c0_1, %c0_2] : memref<128x128xbf16, #tpu.memory_space<vmem>>, vector<128x128xbf16>
    %c0_3 = arith.constant 0 : index
    %c0_4 = arith.constant 0 : index
    %2 = vector.load %arg4[%c0_3, %c0_4] : memref<1x128xf32, #tpu.memory_space<vmem>>, vector<1x128xf32>
    %cst = arith.constant dense<0.000000e+00> : vector<128x128xf32>
    %3 = tpu.matmul %0, %1, %cst {dimension_numbers = #tpu.dot_dimension_numbers<[1], [0], [0], [1], [0, 0, 1, 1], [], []>} : vector<128x128xbf16>, vector<128x128xbf16>, vector<128x128xf32> -> vector<128x128xf32>
    %4 = vector.broadcast %2 : vector<1x128xf32> to vector<128x128xf32>
    %5 = arith.addf %3, %4 : vector<128x128xf32>
    %cst_5 = arith.constant 5.000000e-01 : f32
    %6 = vector.broadcast %cst_5 : f32 to vector<128x128xf32>
    %7 = arith.mulf %6, %5 : vector<128x128xf32>
    %8 = math.tanh %7 : vector<128x128xf32>
    %cst_6 = arith.constant 5.000000e-01 : f32
    %9 = vector.broadcast %cst_6 : f32 to vector<128x128xf32>
    %10 = arith.mulf %9, %8 : vector<128x128xf32>
    %cst_7 = arith.constant 5.000000e-01 : f32
    %11 = vector.broadcast %cst_7 : f32 to vector<128x128xf32>
    %12 = arith.addf %10, %11 : vector<128x128xf32>
    %c0_8 = arith.constant 0 : index
    %c0_9 = arith.constant 0 : index
    %13 = vector.load %arg5[%c0_8, %c0_9] : memref<128x128xbf16, #tpu.memory_space<vmem>>, vector<128x128xbf16>
    %c0_10 = arith.constant 0 : index
    %c0_11 = arith.constant 0 : index
    %14 = vector.load %arg6[%c0_10, %c0_11] : memref<1x128xf32, #tpu.memory_space<vmem>>, vector<1x128xf32>
    %15 = arith.truncf %12 : vector<128x128xf32> to vector<128x128xbf16>
    %cst_12 = arith.constant dense<0.000000e+00> : vector<128x128xf32>
    %16 = tpu.matmul %15, %13, %cst_12 {dimension_numbers = #tpu.dot_dimension_numbers<[1], [0], [0], [1], [0, 0, 1, 1], [], []>} : vector<128x128xbf16>, vector<128x128xbf16>, vector<128x128xf32> -> vector<128x128xf32>
    %17 = vector.broadcast %14 : vector<1x128xf32> to vector<128x128xf32>
    %18 = arith.addf %16, %17 : vector<128x128xf32>
    %cst_13 = arith.constant 5.000000e-01 : f32
    %19 = vector.broadcast %cst_13 : f32 to vector<128x128xf32>
    %20 = arith.mulf %19, %18 : vector<128x128xf32>
    %21 = math.tanh %20 : vector<128x128xf32>
    %cst_14 = arith.constant 5.000000e-01 : f32
    %22 = vector.broadcast %cst_14 : f32 to vector<128x128xf32>
    %23 = arith.mulf %22, %21 : vector<128x128xf32>
    %cst_15 = arith.constant 5.000000e-01 : f32
    %24 = vector.broadcast %cst_15 : f32 to vector<128x128xf32>
    %25 = arith.addf %23, %24 : vector<128x128xf32>
    %26 = math.exp %25 : vector<128x128xf32>
    %c0_16 = arith.constant 0 : index
    %c0_17 = arith.constant 0 : index
    %27 = vector.load %arg2[%c0_16, %c0_17] : memref<1x128xf32, #tpu.memory_space<vmem>>, vector<1x128xf32>
    %28 = vector.broadcast %27 : vector<1x128xf32> to vector<128x128xf32>
    %29 = arith.mulf %26, %28 : vector<128x128xf32>
    %cst_18 = arith.constant dense<0.000000e+00> : vector<128xf32>
    %30 = vector.multi_reduction <add>, %29, %cst_18 [1] : vector<128x128xf32> to vector<128xf32>
    %31 = vector.shape_cast %30 : vector<128xf32> to vector<128x1xf32>
    %cst_19 = arith.constant 1.000000e+00 : f32
    %32 = vector.broadcast %cst_19 : f32 to vector<128x1xf32>
    %33 = arith.divf %32, %31 : vector<128x1xf32>
    %34 = vector.broadcast %33 : vector<128x1xf32> to vector<128x128xf32>
    %35 = arith.mulf %29, %34 : vector<128x128xf32>
    %c0_20 = arith.constant 0 : index
    %c0_21 = arith.constant 0 : index
    %36 = vector.load %arg7[%c0_20, %c0_21] : memref<128x128xf32, #tpu.memory_space<vmem>>, vector<128x128xf32>
    tpu.vector_store %arg7[%c0_20, %c0_21], %35 {strides = array<i32>} : memref<128x128xf32, #tpu.memory_space<vmem>>, vector<128x128xf32>,
    return
  }
  func.func @transform_0(%arg0: i32) -> (i32, i32) {
    %c0_i32 = arith.constant 0 : i32
    %c0_i32_0 = arith.constant 0 : i32
    return %arg0, %c0_i32 : i32, i32
  }
  func.func @transform_1(%arg0: i32) -> (i32, i32) {
    %c0_i32 = arith.constant 0 : i32
    %c0_i32_0 = arith.constant 0 : i32
    %c0_i32_1 = arith.constant 0 : i32
    return %c0_i32, %c0_i32_0 : i32, i32
  }
  func.func @transform_2(%arg0: i32) -> (i32, i32) {
    %c0_i32 = arith.constant 0 : i32
    %c0_i32_0 = arith.constant 0 : i32
    %c0_i32_1 = arith.constant 0 : i32
    return %c0_i32, %c0_i32_0 : i32, i32
  }
  func.func @transform_3(%arg0: i32) -> (i32, i32) {
    %c0_i32 = arith.constant 0 : i32
    %c0_i32_0 = arith.constant 0 : i32
    %c0_i32_1 = arith.constant 0 : i32
    return %c0_i32, %c0_i32_0 : i32, i32
  }
  func.func @transform_4(%arg0: i32) -> (i32, i32) {
    %c0_i32 = arith.constant 0 : i32
    %c0_i32_0 = arith.constant 0 : i32
    %c0_i32_1 = arith.constant 0 : i32
    return %c0_i32, %c0_i32_0 : i32, i32
  }
  func.func @transform_5(%arg0: i32) -> (i32, i32) {
    %c0_i32 = arith.constant 0 : i32
    %c0_i32_0 = arith.constant 0 : i32
    %c0_i32_1 = arith.constant 0 : i32
    return %c0_i32, %c0_i32_0 : i32, i32
  }
  func.func @transform_6(%arg0: i32) -> (i32, i32) {
    %c0_i32 = arith.constant 0 : i32
    %c0_i32_0 = arith.constant 0 : i32
    return %arg0, %c0_i32 : i32, i32
  }
}

</mosaic_0001>

<llo_original>
// kernel: mlp_forward.1
$region0: #{mlp_forward.1}
  #allocation0 [shape = 'u32[]', space=smem, size = 0x4, offset = 0x4, fixed_abs, tag = 'smem constant byte address 0x4 - core index']
  #allocation1 [shape = 'u32[144,128]{1,0:T(1,128)}', space=vmem, size = 0x12000, scoped, tag = 'internal scratch']
  %s0 = inlined_call_operand.hbm [shape: bf16[512,128], index: 0, kind: input, shape index: {}]
  %s1 = inlined_call_operand.vmem [shape: f32[1,128], index: 1, kind: input, shape index: {}]
  %s2 = inlined_call_operand.hbm [shape: bf16[128,128], index: 2, kind: input, shape index: {}]
  %s3 = inlined_call_operand.vmem [shape: f32[1,128], index: 3, kind: input, shape index: {}]
  %s4 = inlined_call_operand.hbm [shape: bf16[128,128], index: 4, kind: input, shape index: {}]
  %s5 = inlined_call_operand.vmem [shape: f32[1,128], index: 5, kind: input, shape index: {}]
  %s6 = inlined_call_operand.vmem [shape: f32[512,128], index: 6, kind: output, shape index: {}]
  %s7 = sld [smem:[#allocation0]]
  $region69: #{mlp_forward.1} parent=0
    _
  %s9 = ssub.s32 1, %s7
  %s10 = scalar_select 0, %s9, %s7
  $region1: #{mlp_forward.1} parent=0
    #allocation2 [shape = 'u8[65536]{0}', space=vmem, size = 0x10000, scoped, tag = 'input window, operand 0']
    #allocation3 [shape = 's32[2]{0}', space=sflag, size = 0x8, scoped, tag = 'scoped memory for mlp_forward.1']
    #allocation4 [shape = 'u8[32768]{0}', space=vmem, size = 0x8000, scoped, tag = 'input window, operand 2, single buffered']
    #allocation5 [shape = 's32[1]{0}', space=sflag, size = 0x4, scoped, tag = 'scoped memory for mlp_forward.1']
    #allocation6 [shape = 'u8[32768]{0}', space=vmem, size = 0x8000, scoped, tag = 'input window, operand 4, single buffered']
    %11 = vsyncpa [#allocation3], 0
    %s12 = scalar_lea.sflag [#allocation3], 1
    %13 = vsyncpa %s12, 0
    %14 = vsyncpa [#allocation5], 0
    loop: start=0, step=1, limit=6
    $region2: #{mlp_forward.1} parent=1 // loop_pre_header
      _
    $region3: #{mlp_forward.1} parent=1 // loop_header
      %s16 = sphi 0, %s20
      %p17 = scmp.ge.s32.totalorder %s16, 6
      %s26 = sphi 0, %s28
      %s29 = sphi 0, %s26
      %s30 = sphi 0, %s29
      %s46 = sphi 0, %s30
      %s50 = sphi 0, %s50
      %s52 = sphi 0, %s50
      %s53 = sphi 0, %s52
      %s67 = sphi 0, %s53
      %s71 = sphi 0, %s71
      %s73 = sphi 0, %s71
      %s74 = sphi 0, %s73
      %s88 = sphi 0, %s74
      %s92 = sphi 0, %s92
      %s94 = sphi 0, %s92
      %s95 = sphi 0, %s94
      %s109 = sphi 0, %s95
      %s113 = sphi 0, %s113
      %s115 = sphi 0, %s113
      %s116 = sphi 0, %s115
      %s130 = sphi 0, %s116
      %s134 = sphi 0, %s134
      %s136 = sphi 0, %s134
      %s137 = sphi 0, %s136
      %s151 = sphi 0, %s137
      %s157 = sphi 0, %s159
      %s160 = sphi 0, %s157
      %s161 = sphi 0, %s160
      %s177 = sphi 0, %s161
    $region4: #{mlp_forward.1} parent=1 // loop_header_branch
      %19 = sbr.rel (%p17) target = $region8
    $region5: #{mlp_forward.1} parent=1 // loop_body
      %s21 = ssub.s32 %s16, 1
      %s22 = ssub.s32 %s16, 2
      %s23 = sadd.s32 %s16, 1
      %s24 = ssub.s32 %s16, %s23
      %p25 = scmp.eq.s32.totalorder %s24, 0
      %s27 = sadd.s32 %s26, 1
      %s28 = scalar_select %p25, %s26, %s27
      %p31 = pneg %p25
      %p32 = scmp.eq.s32.totalorder %s16, 3
      %p33 = por %p31, %p32
      %p34 = scmp.ne.s32.totalorder %s26, %s29
      %p35 = scmp.eq.s32.totalorder %s16, 0
      %p36 = por %p34, %p35
      %p37 = scmp.ne.s32.totalorder %s26, %s29
      %p38 = scmp.eq.s32.totalorder %s21, 3
      %p39 = por %p37, %p38
      %p40 = scmp.ne.s32.totalorder %s29, %s30
      %p41 = scmp.eq.s32.totalorder %s21, 0
      %p42 = por %p40, %p41
      %p43 = scmp.ne.s32.totalorder %s29, %s30
      %p44 = scmp.eq.s32.totalorder %s22, 3
      %p45 = por %p43, %p44
      %p47 = scmp.ne.s32.totalorder %s30, %s46
      %p48 = scmp.eq.s32.totalorder %s22, 0
      %p49 = por %p47, %p48
      %s51 = sadd.s32 %s50, 1
      %p54 = scmp.eq.s32.totalorder %s16, 3
      %p55 = scmp.ne.s32.totalorder %s50, %s52
      %p56 = scmp.eq.s32.totalorder %s16, 0
      %p57 = por %p55, %p56
      %p58 = scmp.ne.s32.totalorder %s50, %s52
      %p59 = scmp.eq.s32.totalorder %s21, 3
      %p60 = por %p58, %p59
      %p61 = scmp.ne.s32.totalorder %s52, %s53
      %p62 = scmp.eq.s32.totalorder %s21, 0
      %p63 = por %p61, %p62
      %p64 = scmp.ne.s32.totalorder %s52, %s53
      %p65 = scmp.eq.s32.totalorder %s22, 3
      %p66 = por %p64, %p65
      %p68 = scmp.ne.s32.totalorder %s53, %s67
      %p69 = scmp.eq.s32.totalorder %s22, 0
      %p70 = por %p68, %p69
      %s72 = sadd.s32 %s71, 1
      %p75 = scmp.eq.s32.totalorder %s16, 3
      %p76 = scmp.ne.s32.totalorder %s71, %s73
      %p77 = scmp.eq.s32.totalorder %s16, 0
      %p78 = por %p76, %p77
      %p79 = scmp.ne.s32.totalorder %s71, %s73
      %p80 = scmp.eq.s32.totalorder %s21, 3
      %p81 = por %p79, %p80
      %p82 = scmp.ne.s32.totalorder %s73, %s74
      %p83 = scmp.eq.s32.totalorder %s21, 0
      %p84 = por %p82, %p83
      %p85 = scmp.ne.s32.totalorder %s73, %s74
      %p86 = scmp.eq.s32.totalorder %s22, 3
      %p87 = por %p85, %p86
      %p89 = scmp.ne.s32.totalorder %s74, %s88
      %p90 = scmp.eq.s32.totalorder %s22, 0
      %p91 = por %p89, %p90
      %s93 = sadd.s32 %s92, 1
      %p96 = scmp.eq.s32.totalorder %s16, 3
      %p97 = scmp.ne.s32.totalorder %s92, %s94
      %p98 = scmp.eq.s32.totalorder %s16, 0
      %p99 = por %p97, %p98
      %p100 = scmp.ne.s32.totalorder %s92, %s94
      %p101 = scmp.eq.s32.totalorder %s21, 3
      %p102 = por %p100, %p101
      %p103 = scmp.ne.s32.totalorder %s94, %s95
      %p104 = scmp.eq.s32.totalorder %s21, 0
      %p105 = por %p103, %p104
      %p106 = scmp.ne.s32.totalorder %s94, %s95
      %p107 = scmp.eq.s32.totalorder %s22, 3
      %p108 = por %p106, %p107
      %p110 = scmp.ne.s32.totalorder %s95, %s109
      %p111 = scmp.eq.s32.totalorder %s22, 0
      %p112 = por %p110, %p111
      %s114 = sadd.s32 %s113, 1
      %p117 = scmp.eq.s32.totalorder %s16, 3
      %p118 = scmp.ne.s32.totalorder %s113, %s115
      %p119 = scmp.eq.s32.totalorder %s16, 0
      %p120 = por %p118, %p119
      %p121 = scmp.ne.s32.totalorder %s113, %s115
      %p122 = scmp.eq.s32.totalorder %s21, 3
      %p123 = por %p121, %p122
      %p124 = scmp.ne.s32.totalorder %s115, %s116
      %p125 = scmp.eq.s32.totalorder %s21, 0
      %p126 = por %p124, %p125
      %p127 = scmp.ne.s32.totalorder %s115, %s116
      %p128 = scmp.eq.s32.totalorder %s22, 3
      %p129 = por %p127, %p128
      %p131 = scmp.ne.s32.totalorder %s116, %s130
      %p132 = scmp.eq.s32.totalorder %s22, 0
      %p133 = por %p131, %p132
      %s135 = sadd.s32 %s134, 1
      %p138 = scmp.eq.s32.totalorder %s16, 3
      %p139 = scmp.ne.s32.totalorder %s134, %s136
      %p140 = scmp.eq.s32.totalorder %s16, 0
      %p141 = por %p139, %p140
      %p142 = scmp.ne.s32.totalorder %s134, %s136
      %p143 = scmp.eq.s32.totalorder %s21, 3
      %p144 = por %p142, %p143
      %p145 = scmp.ne.s32.totalorder %s136, %s137
      %p146 = scmp.eq.s32.totalorder %s21, 0
      %p147 = por %p145, %p146
      %p148 = scmp.ne.s32.totalorder %s136, %s137
      %p149 = scmp.eq.s32.totalorder %s22, 3
      %p150 = por %p148, %p149
      %p152 = scmp.ne.s32.totalorder %s137, %s151
      %p153 = scmp.eq.s32.totalorder %s22, 0
      %p154 = por %p152, %p153
      %s155 = ssub.s32 %s16, %s23
      %p156 = scmp.eq.s32.totalorder %s155, 0
      %s158 = sadd.s32 %s157, 1
      %s159 = scalar_select %p156, %s157, %s158
      %p162 = pneg %p156
      %p163 = scmp.eq.s32.totalorder %s16, 3
      %p164 = por %p162, %p163
      %p165 = scmp.ne.s32.totalorder %s157, %s160
      %p166 = scmp.eq.s32.totalorder %s16, 0
      %p167 = por %p165, %p166
      %p168 = scmp.ne.s32.totalorder %s157, %s160
      %p169 = scmp.eq.s32.totalorder %s21, 3
      %p170 = por %p168, %p169
      %p171 = scmp.ne.s32.totalorder %s160, %s161
      %p172 = scmp.eq.s32.totalorder %s21, 0
      %p173 = por %p171, %p172
      %p174 = scmp.ne.s32.totalorder %s160, %s161
      %p175 = scmp.eq.s32.totalorder %s22, 3
      %p176 = por %p174, %p175
      %p178 = scmp.ne.s32.totalorder %s161, %s177
      %p179 = scmp.eq.s32.totalorder %s22, 0
      %p180 = por %p178, %p179
      %p181 = scmp.le.s32.totalorder 1, %s16
      %p182 = scmp.lt.s32.totalorder %s16, 5
      %p183 = pnand %p181, %p182
      %p184 = pneg %p183
      // Predicated region
      $region9: #{mlp_forward.1} parent=5 // pred_check
        _
      $region10: #{mlp_forward.1} parent=5 // pred_check_branch
        %186 = sbr.rel (%p183) target = $region12
      $region11: #{mlp_forward.1} parent=5 // pred_region
        %s187 = ssub.s32 %s16, 1
        // Predicated region
        $region13: #{mlp_forward.1} parent=11 // pred_check
          %p188 = pneg %p63
        $region14: #{mlp_forward.1} parent=11 // pred_check_branch
          %190 = sbr.rel (%p188) target = $region16
        $region15: #{mlp_forward.1} parent=11 // pred_region
          _
        $region16: #{mlp_forward.1} parent=11 // pred_fallthru
          _
        // Predicated region
        $region17: #{mlp_forward.1} parent=11 // pred_check
          %p191 = pneg %p84
        $region18: #{mlp_forward.1} parent=11 // pred_check_branch
          %193 = sbr.rel (%p191) target = $region20
        $region19: #{mlp_forward.1} parent=11 // pred_region
          %s195 = ssub.s32 1024, 1024
          %196 = vsyncadd [#allocation5], %s195
          %s197 = sshll.u32 [#allocation4], 4
          %s198 = int_to_ptr.vmem [resolvable:$true] %s197
          %203 = dma.hbm_to_vmem [thread:$0]  %s2, 1024, %s198, [#allocation5], 64, 64, 4
        $region20: #{mlp_forward.1} parent=11 // pred_fallthru
          _
        // Predicated region
        $region21: #{mlp_forward.1} parent=11 // pred_check
          %p204 = pneg %p105
        $region22: #{mlp_forward.1} parent=11 // pred_check_branch
          %206 = sbr.rel (%p204) target = $region24
        $region23: #{mlp_forward.1} parent=11 // pred_region
          _
        $region24: #{mlp_forward.1} parent=11 // pred_fallthru
          _
        // Predicated region
        $region25: #{mlp_forward.1} parent=11 // pred_check
          %p207 = pneg %p126
        $region26: #{mlp_forward.1} parent=11 // pred_check_branch
          %209 = sbr.rel (%p207) target = $region28
        $region27: #{mlp_forward.1} parent=11 // pred_region
          %s211 = ssub.s32 1024, 1024
          %212 = vsyncadd [#allocation5], %s211
          %s213 = sshll.u32 [#allocation6], 4
          %s214 = int_to_ptr.vmem [resolvable:$true] %s213
          %219 = dma.hbm_to_vmem [thread:$0]  %s4, 1024, %s214, [#allocation5], 64, 64, 4
        $region28: #{mlp_forward.1} parent=11 // pred_fallthru
          _
        // Predicated region
        $region29: #{mlp_forward.1} parent=11 // pred_check
          %p220 = pneg %p147
        $region30: #{mlp_forward.1} parent=11 // pred_check_branch
          %222 = sbr.rel (%p220) target = $region32
        $region31: #{mlp_forward.1} parent=11 // pred_region
          _
        $region32: #{mlp_forward.1} parent=11 // pred_fallthru
          _
      $region12: #{mlp_forward.1} parent=5 // pred_fallthru
        _
      %p223 = scmp.lt.s32.totalorder %s16, 4
      // Predicated region
      $region33: #{mlp_forward.1} parent=5 // pred_check
        %p224 = pneg %p223
      $region34: #{mlp_forward.1} parent=5 // pred_check_branch
        %226 = sbr.rel (%p224) target = $region36
      $region35: #{mlp_forward.1} parent=5 // pred_region
        // Predicated region
        $region37: #{mlp_forward.1} parent=35 // pred_check
          %p227 = pneg %p36
        $region38: #{mlp_forward.1} parent=35 // pred_check_branch
          %229 = sbr.rel (%p227) target = $region40
        $region39: #{mlp_forward.1} parent=35 // pred_region
          %s230 = sand.u32 %s26, 1
          %s231 = scalar_lea.sflag [#allocation3], %s230
          %s232 = sand.u32 %s26, 1
          %s233 = smul.addr %s232, 64
          %s234 = scalar_lea.vmem [#allocation2], %s233
          %s235 = smul.u32 16, %s16
          %s237 = ssub.s32 1024, 1024
          %238 = vsyncadd %s231, %s237
          %s239 = smul.addr %s235, 64
          %s240 = scalar_lea.hbm %s0, %s239
          %s241 = sshll.u32 %s234, 4
          %s242 = int_to_ptr.vmem [resolvable:$true] %s241
          %247 = dma.hbm_to_vmem [thread:$0]  %s240, 1024, %s242, %s231, 64, 64, 4
        $region40: #{mlp_forward.1} parent=35 // pred_fallthru
          _
      $region36: #{mlp_forward.1} parent=5 // pred_fallthru
        _
      %p248 = scmp.le.s32.totalorder 1, %s16
      %p249 = scmp.lt.s32.totalorder %s16, 5
      %p250 = pnand %p248, %p249
      %p251 = pneg %p250
      // Predicated region
      $region41: #{mlp_forward.1} parent=5 // pred_check
        _
      $region42: #{mlp_forward.1} parent=5 // pred_check_branch
        %253 = sbr.rel (%p250) target = $region44
      $region43: #{mlp_forward.1} parent=5 // pred_region
        %s254 = ssub.s32 %s16, 1
        %s255 = sand.u32 %s29, 1
        %s256 = scalar_lea.sflag [#allocation3], %s255
        %s257 = sand.u32 %s29, 1
        %s258 = smul.addr %s257, 64
        %s259 = scalar_lea.vmem [#allocation2], %s258
        // Predicated region
        $region45: #{mlp_forward.1} parent=43 // pred_check
          %p260 = pneg %p42
        $region46: #{mlp_forward.1} parent=43 // pred_check_branch
          %262 = sbr.rel (%p260) target = $region48
        $region47: #{mlp_forward.1} parent=43 // pred_region
          %263 = dma.done %s256, 1024
        $region48: #{mlp_forward.1} parent=43 // pred_fallthru
          _
        // Predicated region
        $region49: #{mlp_forward.1} parent=43 // pred_check
          %p264 = pneg %p84
        $region50: #{mlp_forward.1} parent=43 // pred_check_branch
          %266 = sbr.rel (%p264) target = $region52
        $region51: #{mlp_forward.1} parent=43 // pred_region
          %267 = dma.done [#allocation5], 1024
        $region52: #{mlp_forward.1} parent=43 // pred_fallthru
          _
        // Predicated region
        $region53: #{mlp_forward.1} parent=43 // pred_check
          %p268 = pneg %p126
        $region54: #{mlp_forward.1} parent=43 // pred_check_branch
          %270 = sbr.rel (%p268) target = $region56
        $region55: #{mlp_forward.1} parent=43 // pred_region
          %271 = dma.done [#allocation5], 1024
        $region56: #{mlp_forward.1} parent=43 // pred_fallthru
          _
        %s272 = sand.u32 %s29, 1
        %s273 = scalar_lea.sflag [#allocation3], %s272
        %s274 = sand.u32 %s29, 1
        %s275 = smul.addr %s274, 64
        %s276 = scalar_lea.vmem [#allocation2], %s275
        %p277 = pneg %p42
        %p278 = pneg %p39
        %p279 = pneg %p63
        %p280 = pneg %p60
        %p281 = pneg %p84
        %p282 = pneg %p81
        %p283 = pneg %p105
        %p284 = pneg %p102
        %p285 = pneg %p126
        %p286 = pneg %p123
        %p287 = pneg %p147
        %p288 = pneg %p144
        %p289 = pneg %p173
        %p290 = pneg %p170
        %s291 = smul.u32 16, %s21
        %p292 = scmp.lt.s32.totalorder %s291, 63
        %s293 = scalar_select %p292, %s291, 63
        %s294 = smul.addr %s293, 8
        %s295 = scalar_lea.vmem %s6, %s294
        %s296 = smul.u32 16, %s21
        %s297 = smul.u32 16, %s21
        %p298 = scmp.lt.s32.totalorder %s297, 63
        %s299 = scalar_select %p298, %s297, 63
        %s300 = smul.addr %s299, 8
        %s301 = scalar_lea.vmem %s6, %s300
        %s302 = smul.u32 16, %s21
        %v304 = vld [vmem:[%s259] sm:$0xf]
        %v305 = vld [vmem:[%s259 + $0x4] sm:$0xf]
        %v306 = vld [vmem:[%s259 + $0x8] sm:$0xf]
        %v307 = vld [vmem:[%s259 + $0xc] sm:$0xf]
        %v308 = vld [vmem:[%s259 + $0x10] sm:$0xf]
        %v309 = vld [vmem:[%s259 + $0x14] sm:$0xf]
        %v310 = vld [vmem:[%s259 + $0x18] sm:$0xf]
        %v311 = vld [vmem:[%s259 + $0x1c] sm:$0xf]
        %v312 = vld [vmem:[%s259 + $0x20] sm:$0xf]
        %v313 = vld [vmem:[%s259 + $0x24] sm:$0xf]
        %v314 = vld [vmem:[%s259 + $0x28] sm:$0xf]
        %v315 = vld [vmem:[%s259 + $0x2c] sm:$0xf]
        %v316 = vld [vmem:[%s259 + $0x30] sm:$0xf]
        %v317 = vld [vmem:[%s259 + $0x34] sm:$0xf]
        %v318 = vld [vmem:[%s259 + $0x38] sm:$0xf]
        %v319 = vld [vmem:[%s259 + $0x3c] sm:$0xf]
        %v320 = vld [vmem:[#allocation4] sm:$0xf]
        %v321 = vld [vmem:[#allocation4 + $0x4] sm:$0xf]
        %v322 = vld [vmem:[#allocation4 + $0x8] sm:$0xf]
        %v323 = vld [vmem:[#allocation4 + $0xc] sm:$0xf]
        %v324 = vld [vmem:[#allocation4 + $0x10] sm:$0xf]
        %v325 = vld [vmem:[#allocation4 + $0x14] sm:$0xf]
        %v326 = vld [vmem:[#allocation4 + $0x18] sm:$0xf]
        %v327 = vld [vmem:[#allocation4 + $0x1c] sm:$0xf]
        %v328 = vld [vmem:[#allocation4 + $0x20] sm:$0xf]
        %v329 = vld [vmem:[#allocation4 + $0x24] sm:$0xf]
        %v330 = vld [vmem:[#allocation4 + $0x28] sm:$0xf]
        %v331 = vld [vmem:[#allocation4 + $0x2c] sm:$0xf]
        %v332 = vld [vmem:[#allocation4 + $0x30] sm:$0xf]
        %v333 = vld [vmem:[#allocation4 + $0x34] sm:$0xf]
        %v334 = vld [vmem:[#allocation4 + $0x38] sm:$0xf]
        %v335 = vld [vmem:[#allocation4 + $0x3c] sm:$0xf]
        %v336 = vld [vmem:[%s3] sm:$0x1]
        %v338 = vlaneseq
        %v339 = vshrl.u32 %v338, 7
        %v340 = vsub.s32 0, %v339
        %v341 = vrot.slane %v336, %v340
        %v359 = vunpack.c.l.b16 %v304
        %v360 = vunpack.c.l.b16 %v305
        %v361 = vunpack.c.l.b16 %v306
        %v362 = vunpack.c.l.b16 %v307
        %v363 = vunpack.c.l.b16 %v308
        %v364 = vunpack.c.l.b16 %v309
        %v365 = vunpack.c.l.b16 %v310
        %v366 = vunpack.c.l.b16 %v311
        %v367 = vunpack.c.l.b16 %v312
        %v368 = vunpack.c.l.b16 %v313
        %v369 = vunpack.c.l.b16 %v314
        %v370 = vunpack.c.l.b16 %v315
        %v371 = vunpack.c.l.b16 %v316
        %v372 = vunpack.c.l.b16 %v317
        %v373 = vunpack.c.l.b16 %v318
        %v374 = vunpack.c.l.b16 %v319
        %v375 = vpack.c.b16 %v360, %v359
        %v376 = vpack.c.b16 %v362, %v361
        %v377 = vpack.c.b16 %v364, %v363
        %v378 = vpack.c.b16 %v366, %v365
        %v379 = vpack.c.b16 %v368, %v367
        %v380 = vpack.c.b16 %v370, %v369
        %v381 = vpack.c.b16 %v372, %v371
        %v382 = vpack.c.b16 %v374, %v373
        %v407 = vunpack.c.l.b16 %v320
        %v408 = vunpack.c.l.b16 %v321
        %v409 = vunpack.c.l.b16 %v322
        %v410 = vunpack.c.l.b16 %v323
        %v411 = vunpack.c.l.b16 %v324
        %v412 = vunpack.c.l.b16 %v325
        %v413 = vunpack.c.l.b16 %v326
        %v414 = vunpack.c.l.b16 %v327
        %v415 = vunpack.c.l.b16 %v328
        %v416 = vunpack.c.l.b16 %v329
        %v417 = vunpack.c.l.b16 %v330
        %v418 = vunpack.c.l.b16 %v331
        %v419 = vunpack.c.l.b16 %v332
        %v420 = vunpack.c.l.b16 %v333
        %v421 = vunpack.c.l.b16 %v334
        %v422 = vunpack.c.l.b16 %v335
        %v423 = vpack.c.b16 %v408, %v407
        %v424 = vpack.c.b16 %v410, %v409
        %v425 = vpack.c.b16 %v412, %v411
        %v426 = vpack.c.b16 %v414, %v413
        %v427 = vpack.c.b16 %v416, %v415
        %v428 = vpack.c.b16 %v418, %v417
        %v429 = vpack.c.b16 %v420, %v419
        %v430 = vpack.c.b16 %v422, %v421
        %439 = vmatprep.subr.bf16.mxu0 0
        %440 = vmatpush1.bf16.msra.mxu0 %v430
        %441 = vmatprep.subr.bf16.mxu0 0
        %442 = vmatpush1.bf16.msra.mxu0 %v429
        %443 = vmatprep.subr.bf16.mxu0 0
        %444 = vmatpush1.bf16.msra.mxu0 %v428
        %445 = vmatprep.subr.bf16.mxu0 0
        %446 = vmatpush1.bf16.msra.mxu0 %v427
        %447 = vmatprep.subr.bf16.mxu0 0
        %448 = vmatpush1.bf16.msra.mxu0 %v426
        %449 = vmatprep.subr.bf16.mxu0 0
        %450 = vmatpush1.bf16.msra.mxu0 %v425
        %451 = vmatprep.subr.bf16.mxu0 0
        %452 = vmatpush1.bf16.msra.mxu0 %v424
        %453 = vmatprep.subr.bf16.mxu0 0
        %454 = vmatpush1.bf16.msra.mxu0 %v423
        %455 = vmatprep.subr.bf16.mxu0 0
        %456 = vmatpush2.bf16.msra.mxu0 0
        %457 = vmatprep.subr.bf16.mxu0 0
        %458 = vmatpush2.bf16.msra.mxu0 0
        %459 = vmatprep.subr.bf16.mxu0 0
        %460 = vmatpush2.bf16.msra.mxu0 0
        %461 = vmatprep.subr.bf16.mxu0 0
        %462 = vmatpush2.bf16.msra.mxu0 0
        %463 = vmatprep.subr.bf16.mxu0 0
        %464 = vmatpush2.bf16.msra.mxu0 0
        %465 = vmatprep.subr.bf16.mxu0 0
        %466 = vmatpush2.bf16.msra.mxu0 0
        %467 = vmatprep.subr.bf16.mxu0 0
        %468 = vmatpush2.bf16.msra.mxu0 0
        %469 = vmatprep.subr.bf16.mxu0 0
        %470 = vmatpush2.bf16.msra.mxu0 0
        %471 = vmatprep.mubr.bf16.mxu0 0
        %472 = vmatmul.mubr.bf16.gmra.mxu0 %v375
        %v473 = vpop.f32.mrf.mxu0
        %v474 = vadd.f32 %v341, %v473
        %v475 = vpop.f32.mrf.mxu0
        %v476 = vpop.f32.mrf.mxu0
        %v477 = vadd.f32 %v341, %v476
        %v478 = vpop.f32.mrf.mxu0
        %479 = vmatprep.mubr.bf16.mxu0 0
        %480 = vmatmul.mubr.bf16.gmra.mxu0 %v376
        %v481 = vpop.f32.mrf.mxu0
        %v482 = vadd.f32 %v341, %v481
        %v483 = vpop.f32.mrf.mxu0
        %v484 = vpop.f32.mrf.mxu0
        %v485 = vadd.f32 %v341, %v484
        %v486 = vpop.f32.mrf.mxu0
        %487 = vmatprep.mubr.bf16.mxu0 0
        %488 = vmatmul.mubr.bf16.gmra.mxu0 %v377
        %v489 = vpop.f32.mrf.mxu0
        %v490 = vadd.f32 %v341, %v489
        %v491 = vpop.f32.mrf.mxu0
        %v492 = vpop.f32.mrf.mxu0
        %v493 = vadd.f32 %v341, %v492
        %v494 = vpop.f32.mrf.mxu0
        %495 = vmatprep.mubr.bf16.mxu0 0
        %496 = vmatmul.mubr.bf16.gmra.mxu0 %v378
        %v497 = vpop.f32.mrf.mxu0
        %v498 = vadd.f32 %v341, %v497
        %v499 = vpop.f32.mrf.mxu0
        %v500 = vpop.f32.mrf.mxu0
        %v501 = vadd.f32 %v341, %v500
        %v502 = vpop.f32.mrf.mxu0
        %503 = vmatprep.mubr.bf16.mxu0 0
        %504 = vmatmul.mubr.bf16.gmra.mxu0 %v379
        %v505 = vpop.f32.mrf.mxu0
        %v506 = vadd.f32 %v341, %v505
        %v507 = vpop.f32.mrf.mxu0
        %v508 = vpop.f32.mrf.mxu0
        %v509 = vadd.f32 %v341, %v508
        %v510 = vpop.f32.mrf.mxu0
        %511 = vmatprep.mubr.bf16.mxu0 0
        %512 = vmatmul.mubr.bf16.gmra.mxu0 %v380
        %v513 = vpop.f32.mrf.mxu0
        %v514 = vadd.f32 %v341, %v513
        %v515 = vpop.f32.mrf.mxu0
        %v516 = vpop.f32.mrf.mxu0
        %v517 = vadd.f32 %v341, %v516
        %v518 = vpop.f32.mrf.mxu0
        %519 = vmatprep.mubr.bf16.mxu0 0
        %520 = vmatmul.mubr.bf16.gmra.mxu0 %v381
        %v521 = vpop.f32.mrf.mxu0
        %v522 = vadd.f32 %v341, %v521
        %v523 = vpop.f32.mrf.mxu0
        %v524 = vpop.f32.mrf.mxu0
        %v525 = vadd.f32 %v341, %v524
        %v526 = vpop.f32.mrf.mxu0
        %527 = vmatprep.mubr.bf16.mxu0 0
        %528 = vmatmul.mubr.bf16.gmra.mxu0 %v382
        %v529 = vpop.f32.mrf.mxu0
        %v530 = vadd.f32 %v341, %v529
        %v531 = vpop.f32.mrf.mxu0
        %v532 = vpop.f32.mrf.mxu0
        %v533 = vadd.f32 %v341, %v532
        %v534 = vpop.f32.mrf.mxu0
        %535 = vdwg.mxu0
        %v536 = vmul.f32 %v474, 0.5
        %v537 = vmul.f32 %v477, 0.5
        %v538 = vmul.f32 %v482, 0.5
        %v539 = vmul.f32 %v485, 0.5
        %v540 = vmul.f32 %v490, 0.5
        %v541 = vmul.f32 %v493, 0.5
        %v542 = vmul.f32 %v498, 0.5
        %v543 = vmul.f32 %v501, 0.5
        %v544 = vmul.f32 %v506, 0.5
        %v545 = vmul.f32 %v509, 0.5
        %v546 = vmul.f32 %v514, 0.5
        %v547 = vmul.f32 %v517, 0.5
        %v548 = vmul.f32 %v522, 0.5
        %v549 = vmul.f32 %v525, 0.5
        %v550 = vmul.f32 %v530, 0.5
        %v551 = vmul.f32 %v533, 0.5
        %v552 = vtanh.pop %v536
        %v553 = vtanh.pop %v537
        %v554 = vtanh.pop %v538
        %v555 = vtanh.pop %v539
        %v556 = vtanh.pop %v540
        %v557 = vtanh.pop %v541
        %v558 = vtanh.pop %v542
        %v559 = vtanh.pop %v543
        %v560 = vtanh.pop %v544
        %v561 = vtanh.pop %v545
        %v562 = vtanh.pop %v546
        %v563 = vtanh.pop %v547
        %v564 = vtanh.pop %v548
        %v565 = vtanh.pop %v549
        %v566 = vtanh.pop %v550
        %v567 = vtanh.pop %v551
        %v568 = vmul.f32 %v552, 0.5
        %v569 = vmul.f32 %v553, 0.5
        %v570 = vmul.f32 %v554, 0.5
        %v571 = vmul.f32 %v555, 0.5
        %v572 = vmul.f32 %v556, 0.5
        %v573 = vmul.f32 %v557, 0.5
        %v574 = vmul.f32 %v558, 0.5
        %v575 = vmul.f32 %v559, 0.5
        %v576 = vmul.f32 %v560, 0.5
        %v577 = vmul.f32 %v561, 0.5
        %v578 = vmul.f32 %v562, 0.5
        %v579 = vmul.f32 %v563, 0.5
        %v580 = vmul.f32 %v564, 0.5
        %v581 = vmul.f32 %v565, 0.5
        %v582 = vmul.f32 %v566, 0.5
        %v583 = vmul.f32 %v567, 0.5
        %v584 = vadd.f32 %v568, 0.5
        %v585 = vadd.f32 %v569, 0.5
        %v586 = vadd.f32 %v570, 0.5
        %v587 = vadd.f32 %v571, 0.5
        %v588 = vadd.f32 %v572, 0.5
        %v589 = vadd.f32 %v573, 0.5
        %v590 = vadd.f32 %v574, 0.5
        %v591 = vadd.f32 %v575, 0.5
        %v592 = vadd.f32 %v576, 0.5
        %v593 = vadd.f32 %v577, 0.5
        %v594 = vadd.f32 %v578, 0.5
        %v595 = vadd.f32 %v579, 0.5
        %v596 = vadd.f32 %v580, 0.5
        %v597 = vadd.f32 %v581, 0.5
        %v598 = vadd.f32 %v582, 0.5
        %v599 = vadd.f32 %v583, 0.5
        %v600 = vld [vmem:[#allocation6] sm:$0xf]
        %v601 = vld [vmem:[#allocation6 + $0x4] sm:$0xf]
        %v602 = vld [vmem:[#allocation6 + $0x8] sm:$0xf]
        %v603 = vld [vmem:[#allocation6 + $0xc] sm:$0xf]
        %v604 = vld [vmem:[#allocation6 + $0x10] sm:$0xf]
        %v605 = vld [vmem:[#allocation6 + $0x14] sm:$0xf]
        %v606 = vld [vmem:[#allocation6 + $0x18] sm:$0xf]
        %v607 = vld [vmem:[#allocation6 + $0x1c] sm:$0xf]
        %v608 = vld [vmem:[#allocation6 + $0x20] sm:$0xf]
        %v609 = vld [vmem:[#allocation6 + $0x24] sm:$0xf]
        %v610 = vld [vmem:[#allocation6 + $0x28] sm:$0xf]
        %v611 = vld [vmem:[#allocation6 + $0x2c] sm:$0xf]
        %v612 = vld [vmem:[#allocation6 + $0x30] sm:$0xf]
        %v613 = vld [vmem:[#allocation6 + $0x34] sm:$0xf]
        %v614 = vld [vmem:[#allocation6 + $0x38] sm:$0xf]
        %v615 = vld [vmem:[#allocation6 + $0x3c] sm:$0xf]
        %v616 = vld [vmem:[%s5] sm:$0x1]
        %v617 = vpack.c.bf16 %v585, %v584
        %v618 = vpack.c.bf16 %v587, %v586
        %v619 = vpack.c.bf16 %v589, %v588
        %v620 = vpack.c.bf16 %v591, %v590
        %v621 = vpack.c.bf16 %v593, %v592
        %v622 = vpack.c.bf16 %v595, %v594
        %v623 = vpack.c.bf16 %v597, %v596
        %v624 = vpack.c.bf16 %v599, %v598
        %v626 = vlaneseq
        %v627 = vshrl.u32 %v626, 7
        %v628 = vsub.s32 0, %v627
        %v629 = vrot.slane %v616, %v628
        %v647 = vunpack.c.l.b16 %v600
        %v648 = vunpack.c.l.b16 %v601
        %v649 = vunpack.c.l.b16 %v602
        %v650 = vunpack.c.l.b16 %v603
        %v651 = vunpack.c.l.b16 %v604
        %v652 = vunpack.c.l.b16 %v605
        %v653 = vunpack.c.l.b16 %v606
        %v654 = vunpack.c.l.b16 %v607
        %v655 = vunpack.c.l.b16 %v608
        %v656 = vunpack.c.l.b16 %v609
        %v657 = vunpack.c.l.b16 %v610
        %v658 = vunpack.c.l.b16 %v611
        %v659 = vunpack.c.l.b16 %v612
        %v660 = vunpack.c.l.b16 %v613
        %v661 = vunpack.c.l.b16 %v614
        %v662 = vunpack.c.l.b16 %v615
        %v663 = vpack.c.b16 %v648, %v647
        %v664 = vpack.c.b16 %v650, %v649
        %v665 = vpack.c.b16 %v652, %v651
        %v666 = vpack.c.b16 %v654, %v653
        %v667 = vpack.c.b16 %v656, %v655
        %v668 = vpack.c.b16 %v658, %v657
        %v669 = vpack.c.b16 %v660, %v659
        %v670 = vpack.c.b16 %v662, %v661
        %679 = vmatprep.subr.bf16.mxu0 0
        %680 = vmatpush1.bf16.msra.mxu0 %v670
        %681 = vmatprep.subr.bf16.mxu0 0
        %682 = vmatpush1.bf16.msra.mxu0 %v669
        %683 = vmatprep.subr.bf16.mxu0 0
        %684 = vmatpush1.bf16.msra.mxu0 %v668
        %685 = vmatprep.subr.bf16.mxu0 0
        %686 = vmatpush1.bf16.msra.mxu0 %v667
        %687 = vmatprep.subr.bf16.mxu0 0
        %688 = vmatpush1.bf16.msra.mxu0 %v666
        %689 = vmatprep.subr.bf16.mxu0 0
        %690 = vmatpush1.bf16.msra.mxu0 %v665
        %691 = vmatprep.subr.bf16.mxu0 0
        %692 = vmatpush1.bf16.msra.mxu0 %v664
        %693 = vmatprep.subr.bf16.mxu0 0
        %694 = vmatpush1.bf16.msra.mxu0 %v663
        %695 = vmatprep.subr.bf16.mxu0 0
        %696 = vmatpush2.bf16.msra.mxu0 0
        %697 = vmatprep.subr.bf16.mxu0 0
        %698 = vmatpush2.bf16.msra.mxu0 0
        %699 = vmatprep.subr.bf16.mxu0 0
        %700 = vmatpush2.bf16.msra.mxu0 0
        %701 = vmatprep.subr.bf16.mxu0 0
        %702 = vmatpush2.bf16.msra.mxu0 0
        %703 = vmatprep.subr.bf16.mxu0 0
        %704 = vmatpush2.bf16.msra.mxu0 0
        %705 = vmatprep.subr.bf16.mxu0 0
        %706 = vmatpush2.bf16.msra.mxu0 0
        %707 = vmatprep.subr.bf16.mxu0 0
        %708 = vmatpush2.bf16.msra.mxu0 0
        %709 = vmatprep.subr.bf16.mxu0 0
        %710 = vmatpush2.bf16.msra.mxu0 0
        %711 = vmatprep.mubr.bf16.mxu0 0
        %712 = vmatmul.mubr.bf16.gmra.mxu0 %v617
        %v713 = vpop.f32.mrf.mxu0
        %v714 = vadd.f32 %v629, %v713
        %v715 = vpop.f32.mrf.mxu0
        %v716 = vpop.f32.mrf.mxu0
        %v717 = vadd.f32 %v629, %v716
        %v718 = vpop.f32.mrf.mxu0
        %719 = vmatprep.mubr.bf16.mxu0 0
        %720 = vmatmul.mubr.bf16.gmra.mxu0 %v618
        %v721 = vpop.f32.mrf.mxu0
        %v722 = vadd.f32 %v629, %v721
        %v723 = vpop.f32.mrf.mxu0
        %v724 = vpop.f32.mrf.mxu0
        %v725 = vadd.f32 %v629, %v724
        %v726 = vpop.f32.mrf.mxu0
        %727 = vmatprep.mubr.bf16.mxu0 0
        %728 = vmatmul.mubr.bf16.gmra.mxu0 %v619
        %v729 = vpop.f32.mrf.mxu0
        %v730 = vadd.f32 %v629, %v729
        %v731 = vpop.f32.mrf.mxu0
        %v732 = vpop.f32.mrf.mxu0
        %v733 = vadd.f32 %v629, %v732
        %v734 = vpop.f32.mrf.mxu0
        %735 = vmatprep.mubr.bf16.mxu0 0
        %736 = vmatmul.mubr.bf16.gmra.mxu0 %v620
        %v737 = vpop.f32.mrf.mxu0
        %v738 = vadd.f32 %v629, %v737
        %v739 = vpop.f32.mrf.mxu0
        %v740 = vpop.f32.mrf.mxu0
        %v741 = vadd.f32 %v629, %v740
        %v742 = vpop.f32.mrf.mxu0
        %743 = vmatprep.mubr.bf16.mxu0 0
        %744 = vmatmul.mubr.bf16.gmra.mxu0 %v621
        %v745 = vpop.f32.mrf.mxu0
        %v746 = vadd.f32 %v629, %v745
        %v747 = vpop.f32.mrf.mxu0
        %v748 = vpop.f32.mrf.mxu0
        %v749 = vadd.f32 %v629, %v748
        %v750 = vpop.f32.mrf.mxu0
        %751 = vmatprep.mubr.bf16.mxu0 0
        %752 = vmatmul.mubr.bf16.gmra.mxu0 %v622
        %v753 = vpop.f32.mrf.mxu0
        %v754 = vadd.f32 %v629, %v753
        %v755 = vpop.f32.mrf.mxu0
        %v756 = vpop.f32.mrf.mxu0
        %v757 = vadd.f32 %v629, %v756
        %v758 = vpop.f32.mrf.mxu0
        %759 = vmatprep.mubr.bf16.mxu0 0
        %760 = vmatmul.mubr.bf16.gmra.mxu0 %v623
        %v761 = vpop.f32.mrf.mxu0
        %v762 = vadd.f32 %v629, %v761
        %v763 = vpop.f32.mrf.mxu0
        %v764 = vpop.f32.mrf.mxu0
        %v765 = vadd.f32 %v629, %v764
        %v766 = vpop.f32.mrf.mxu0
        %767 = vmatprep.mubr.bf16.mxu0 0
        %768 = vmatmul.mubr.bf16.gmra.mxu0 %v624
        %v769 = vpop.f32.mrf.mxu0
        %v770 = vadd.f32 %v629, %v769
        %v771 = vpop.f32.mrf.mxu0
        %v772 = vpop.f32.mrf.mxu0
        %v773 = vadd.f32 %v629, %v772
        %v774 = vpop.f32.mrf.mxu0
        %775 = vdwg.mxu0
        %v776 = vmul.f32 %v714, 0.5
        %v777 = vmul.f32 %v717, 0.5
        %v778 = vmul.f32 %v722, 0.5
        %v779 = vmul.f32 %v725, 0.5
        %v780 = vmul.f32 %v730, 0.5
        %v781 = vmul.f32 %v733, 0.5
        %v782 = vmul.f32 %v738, 0.5
        %v783 = vmul.f32 %v741, 0.5
        %v784 = vmul.f32 %v746, 0.5
        %v785 = vmul.f32 %v749, 0.5
        %v786 = vmul.f32 %v754, 0.5
        %v787 = vmul.f32 %v757, 0.5
        %v788 = vmul.f32 %v762, 0.5
        %v789 = vmul.f32 %v765, 0.5
        %v790 = vmul.f32 %v770, 0.5
        %v791 = vmul.f32 %v773, 0.5
        %v792 = vtanh.pop %v776
        %v793 = vtanh.pop %v777
        %v794 = vtanh.pop %v778
        %v795 = vtanh.pop %v779
        %v796 = vtanh.pop %v780
        %v797 = vtanh.pop %v781
        %v798 = vtanh.pop %v782
        %v799 = vtanh.pop %v783
        %v800 = vtanh.pop %v784
        %v801 = vtanh.pop %v785
        %v802 = vtanh.pop %v786
        %v803 = vtanh.pop %v787
        %v804 = vtanh.pop %v788
        %v805 = vtanh.pop %v789
        %v806 = vtanh.pop %v790
        %v807 = vtanh.pop %v791
        %v808 = vmul.f32 %v792, 0.5
        %v809 = vmul.f32 %v793, 0.5
        %v810 = vmul.f32 %v794, 0.5
        %v811 = vmul.f32 %v795, 0.5
        %v812 = vmul.f32 %v796, 0.5
        %v813 = vmul.f32 %v797, 0.5
        %v814 = vmul.f32 %v798, 0.5
        %v815 = vmul.f32 %v799, 0.5
        %v816 = vmul.f32 %v800, 0.5
        %v817 = vmul.f32 %v801, 0.5
        %v818 = vmul.f32 %v802, 0.5
        %v819 = vmul.f32 %v803, 0.5
        %v820 = vmul.f32 %v804, 0.5
        %v821 = vmul.f32 %v805, 0.5
        %v822 = vmul.f32 %v806, 0.5
        %v823 = vmul.f32 %v807, 0.5
        %v824 = vadd.f32 %v808, 0.5
        %v825 = vadd.f32 %v809, 0.5
        %v826 = vadd.f32 %v810, 0.5
        %v827 = vadd.f32 %v811, 0.5
        %v828 = vadd.f32 %v812, 0.5
        %v829 = vadd.f32 %v813, 0.5
        %v830 = vadd.f32 %v814, 0.5
        %v831 = vadd.f32 %v815, 0.5
        %v832 = vadd.f32 %v816, 0.5
        %v833 = vadd.f32 %v817, 0.5
        %v834 = vadd.f32 %v818, 0.5
        %v835 = vadd.f32 %v819, 0.5
        %v836 = vadd.f32 %v820, 0.5
        %v837 = vadd.f32 %v821, 0.5
        %v838 = vadd.f32 %v822, 0.5
        %v839 = vadd.f32 %v823, 0.5
        %v840 = vmul.f32 %v824, 1.442695
        %v841 = vpow.pop %v840
        %v842 = vmul.f32 %v825, 1.442695
        %v843 = vpow.pop %v842
        %v844 = vmul.f32 %v826, 1.442695
        %v845 = vpow.pop %v844
        %v846 = vmul.f32 %v827, 1.442695
        %v847 = vpow.pop %v846
        %v848 = vmul.f32 %v828, 1.442695
        %v849 = vpow.pop %v848
        %v850 = vmul.f32 %v829, 1.442695
        %v851 = vpow.pop %v850
        %v852 = vmul.f32 %v830, 1.442695
        %v853 = vpow.pop %v852
        %v854 = vmul.f32 %v831, 1.442695
        %v855 = vpow.pop %v854
        %v856 = vmul.f32 %v832, 1.442695
        %v857 = vpow.pop %v856
        %v858 = vmul.f32 %v833, 1.442695
        %v859 = vpow.pop %v858
        %v860 = vmul.f32 %v834, 1.442695
        %v861 = vpow.pop %v860
        %v862 = vmul.f32 %v835, 1.442695
        %v863 = vpow.pop %v862
        %v864 = vmul.f32 %v836, 1.442695
        %v865 = vpow.pop %v864
        %v866 = vmul.f32 %v837, 1.442695
        %v867 = vpow.pop %v866
        %v868 = vmul.f32 %v838, 1.442695
        %v869 = vpow.pop %v868
        %v870 = vmul.f32 %v839, 1.442695
        %v871 = vpow.pop %v870
        %v872 = vld [vmem:[%s1] sm:$0x1]
        %v874 = vlaneseq
        %v875 = vshrl.u32 %v874, 7
        %v876 = vsub.s32 0, %v875
        %v877 = vrot.slane %v872, %v876
        %v879 = vmul.f32 %v841, %v877
        %v880 = vmul.f32 %v843, %v877
        %v881 = vmul.f32 %v845, %v877
        %v882 = vmul.f32 %v847, %v877
        %v883 = vmul.f32 %v849, %v877
        %v884 = vmul.f32 %v851, %v877
        %v885 = vmul.f32 %v853, %v877
        %v886 = vmul.f32 %v855, %v877
        %v887 = vmul.f32 %v857, %v877
        %v888 = vmul.f32 %v859, %v877
        %v889 = vmul.f32 %v861, %v877
        %v890 = vmul.f32 %v863, %v877
        %v891 = vmul.f32 %v865, %v877
        %v892 = vmul.f32 %v867, %v877
        %v893 = vmul.f32 %v869, %v877
        %v894 = vmul.f32 %v871, %v877
        %895 = vadd.xlane.f32.xlu0 %v879
        %v896 = vpop.xlane.xlu0 %895
        %897 = vadd.xlane.f32.xlu0 %v880
        %v898 = vpop.xlane.xlu0 %897
        %899 = vadd.xlane.f32.xlu0 %v881
        %v900 = vpop.xlane.xlu0 %899
        %901 = vadd.xlane.f32.xlu0 %v882
        %v902 = vpop.xlane.xlu0 %901
        %903 = vadd.xlane.f32.xlu0 %v883
        %v904 = vpop.xlane.xlu0 %903
        %905 = vadd.xlane.f32.xlu0 %v884
        %v906 = vpop.xlane.xlu0 %905
        %907 = vadd.xlane.f32.xlu0 %v885
        %v908 = vpop.xlane.xlu0 %907
        %909 = vadd.xlane.f32.xlu0 %v886
        %v910 = vpop.xlane.xlu0 %909
        %911 = vadd.xlane.f32.xlu0 %v887
        %v912 = vpop.xlane.xlu0 %911
        %913 = vadd.xlane.f32.xlu0 %v888
        %v914 = vpop.xlane.xlu0 %913
        %915 = vadd.xlane.f32.xlu0 %v889
        %v916 = vpop.xlane.xlu0 %915
        %917 = vadd.xlane.f32.xlu0 %v890
        %v918 = vpop.xlane.xlu0 %917
        %919 = vadd.xlane.f32.xlu0 %v891
        %v920 = vpop.xlane.xlu0 %919
        %921 = vadd.xlane.f32.xlu0 %v892
        %v922 = vpop.xlane.xlu0 %921
        %923 = vadd.xlane.f32.xlu0 %v893
        %v924 = vpop.xlane.xlu0 %923
        %925 = vadd.xlane.f32.xlu0 %v894
        %v926 = vpop.xlane.xlu0 %925
        %v927 = vrcp.pop %v896
        %v928 = vmul.f32 1.0, %v927
        %v929 = vrcp.pop %v898
        %v930 = vmul.f32 1.0, %v929
        %v931 = vrcp.pop %v900
        %v932 = vmul.f32 1.0, %v931
        %v933 = vrcp.pop %v902
        %v934 = vmul.f32 1.0, %v933
        %v935 = vrcp.pop %v904
        %v936 = vmul.f32 1.0, %v935
        %v937 = vrcp.pop %v906
        %v938 = vmul.f32 1.0, %v937
        %v939 = vrcp.pop %v908
        %v940 = vmul.f32 1.0, %v939
        %v941 = vrcp.pop %v910
        %v942 = vmul.f32 1.0, %v941
        %v943 = vrcp.pop %v912
        %v944 = vmul.f32 1.0, %v943
        %v945 = vrcp.pop %v914
        %v946 = vmul.f32 1.0, %v945
        %v947 = vrcp.pop %v916
        %v948 = vmul.f32 1.0, %v947
        %v949 = vrcp.pop %v918
        %v950 = vmul.f32 1.0, %v949
        %v951 = vrcp.pop %v920
        %v952 = vmul.f32 1.0, %v951
        %v953 = vrcp.pop %v922
        %v954 = vmul.f32 1.0, %v953
        %v955 = vrcp.pop %v924
        %v956 = vmul.f32 1.0, %v955
        %v957 = vrcp.pop %v926
        %v958 = vmul.f32 1.0, %v957
        %v959 = vmul.f32 %v879, %v928
        %v960 = vmul.f32 %v880, %v930
        %v961 = vmul.f32 %v881, %v932
        %v962 = vmul.f32 %v882, %v934
        %v963 = vmul.f32 %v883, %v936
        %v964 = vmul.f32 %v884, %v938
        %v965 = vmul.f32 %v885, %v940
        %v966 = vmul.f32 %v886, %v942
        %v967 = vmul.f32 %v887, %v944
        %v968 = vmul.f32 %v888, %v946
        %v969 = vmul.f32 %v889, %v948
        %v970 = vmul.f32 %v890, %v950
        %v971 = vmul.f32 %v891, %v952
        %v972 = vmul.f32 %v892, %v954
        %v973 = vmul.f32 %v893, %v956
        %v974 = vmul.f32 %v894, %v958
        %975 = vst [vmem:[%s301] sm:$0xff] %v959
        %976 = vst [vmem:[%s301 + $0x8] sm:$0xff] %v960
        %977 = vst [vmem:[%s301 + $0x10] sm:$0xff] %v961
        %978 = vst [vmem:[%s301 + $0x18] sm:$0xff] %v962
        %979 = vst [vmem:[%s301 + $0x20] sm:$0xff] %v963
        %980 = vst [vmem:[%s301 + $0x28] sm:$0xff] %v964
        %981 = vst [vmem:[%s301 + $0x30] sm:$0xff] %v965
        %982 = vst [vmem:[%s301 + $0x38] sm:$0xff] %v966
        %983 = vst [vmem:[%s301 + $0x40] sm:$0xff] %v967
        %984 = vst [vmem:[%s301 + $0x48] sm:$0xff] %v968
        %985 = vst [vmem:[%s301 + $0x50] sm:$0xff] %v969
        %986 = vst [vmem:[%s301 + $0x58] sm:$0xff] %v970
        %987 = vst [vmem:[%s301 + $0x60] sm:$0xff] %v971
        %988 = vst [vmem:[%s301 + $0x68] sm:$0xff] %v972
        %989 = vst [vmem:[%s301 + $0x70] sm:$0xff] %v973
        %990 = vst [vmem:[%s301 + $0x78] sm:$0xff] %v974
        %s991 = smul.u32 16, %s21
        %p992 = scmp.lt.s32.totalorder %s991, 63
        %s993 = scalar_select %p992, %s991, 63
        %s994 = smul.addr %s993, 8
        %s995 = scalar_lea.vmem %s6, %s994
        // Predicated region
        $region57: #{mlp_forward.1} parent=43 // pred_check
          %p996 = pneg %p170
        $region58: #{mlp_forward.1} parent=43 // pred_check_branch
          %998 = sbr.rel (%p996) target = $region60
        $region59: #{mlp_forward.1} parent=43 // pred_region
          %s999 = smul.u32 16, %s21
        $region60: #{mlp_forward.1} parent=43 // pred_fallthru
          _
      $region44: #{mlp_forward.1} parent=5 // pred_fallthru
        _
      %p1000 = scmp.le.s32.totalorder 2, %s16
      // Predicated region
      $region61: #{mlp_forward.1} parent=5 // pred_check
        %p1001 = pneg %p1000
      $region62: #{mlp_forward.1} parent=5 // pred_check_branch
        %1003 = sbr.rel (%p1001) target = $region64
      $region63: #{mlp_forward.1} parent=5 // pred_region
        %s1004 = ssub.s32 %s16, 2
        // Predicated region
        $region65: #{mlp_forward.1} parent=63 // pred_check
          %p1005 = pneg %p176
        $region66: #{mlp_forward.1} parent=63 // pred_check_branch
          %1007 = sbr.rel (%p1005) target = $region68
        $region67: #{mlp_forward.1} parent=63 // pred_region
          %s1008 = smul.u32 16, %s22
          %p1009 = scmp.lt.s32.totalorder %s1008, 63
          %s1010 = scalar_select %p1009, %s1008, 63
          %s1011 = smul.addr %s1010, 8
          %s1012 = scalar_lea.vmem %s6, %s1011
        $region68: #{mlp_forward.1} parent=63 // pred_fallthru
          _
      $region64: #{mlp_forward.1} parent=5 // pred_fallthru
        _
    $region6: #{mlp_forward.1} parent=1 // loop_footer
      %s20 = sadd.s32 1, %s16
    $region7: #{mlp_forward.1} parent=1 // loop_footer_branch
      %15 = sbr.rel target = $region3
    $region8: #{mlp_forward.1} parent=1 // loop_exit
      _
    %1013 = vsyncpa [#allocation3], 1
    %s1014 = scalar_lea.sflag [#allocation3], 1
    %1015 = vsyncpa %s1014, 1
    %1016 = vsyncpa [#allocation5], 1

</llo_original>
